<compile_context>
chip_gen: v6e
topology: v6e:2x2x1
jax: 0.10.0
libtpu: 0.0.40
codegen_flags: <defaults>
</compile_context>

<pallas_src>
import jax
import jax.numpy as jnp
from jax.experimental import pallas as pl
from jax.experimental.pallas import tpu as pltpu


def head_kernel(x_ref, se_w1_ref, se_w2_ref, w7_ref, w_comb_ref, b_comb_ref,
                out_ref):
    x = x_ref[...].astype(jnp.float32)                        # (Bt, C, HW)

    # Spatial sum for SE (1/HW folded into se_w1) and the depthwise 4x4 conv
    # reduction (SE scale applied afterwards since it commutes).
    pooled = jnp.sum(x, axis=2)                               # (Bt, C)
    d = jnp.sum(x * w7_ref[...][None, :, :], axis=2)          # (Bt, C)

    # ---- SEModule (squeeze/excite) ----
    h = jnp.maximum(
        jnp.dot(pooled, se_w1_ref[...],
                preferred_element_type=jnp.float32), 0.0)     # fc1 + ReLU
    s = jax.nn.sigmoid(
        jnp.dot(h, se_w2_ref[...],
                preferred_element_type=jnp.float32))          # fc2 + Sigmoid

    # ---- linear7 * SE scale, then folded BN7 -> W1 -> BN1 -> fc ----
    y = d * s                                                 # (Bt, C)
    out = jnp.dot(y, w_comb_ref[...],
                  preferred_element_type=jnp.float32) + b_comb_ref[...]
    out_ref[...] = out.astype(out_ref.dtype)


def resnext_steroid_head(x_nchw, params, *, batch_tile=None):
    B, C, H, W = x_nchw.shape
    HW = H * W
    OUT = params["w_comb"].shape[1]

    # Free view of NCHW -> (B, C, HW); no standalone transpose launch.
    x = x_nchw.reshape(B, C, HW)

    if batch_tile is None:
        batch_tile = B if B <= 512 else 512
    Bt = batch_tile
    Bp = pl.cdiv(B, Bt) * Bt
    if Bp != B:
        x = jnp.pad(x, ((0, Bp - B), (0, 0), (0, 0)))
    grid = (Bp // Bt,)

    def whole(shape):
        # Whole-array weight block; constant index -> stays resident in VMEM.
        return pl.BlockSpec(shape, lambda i: tuple(0 for _ in shape))

    in_specs = [
        pl.BlockSpec((Bt, C, HW), lambda i: (i, 0, 0)),       # x: batch-tiled
        whole(params["se_w1"].shape),
        whole(params["se_w2"].shape),
        whole(params["w7"].shape),
        whole(params["w_comb"].shape),
        whole(params["b_comb"].shape),
    ]
    out_spec = pl.BlockSpec((Bt, OUT), lambda i: (i, 0))

    out = pl.pallas_call(
        head_kernel,
        out_shape=jax.ShapeDtypeStruct((Bp, OUT), jnp.float32),
        grid=grid,
        in_specs=in_specs,
        out_specs=out_spec,
        compiler_params=pltpu.CompilerParams(
            dimension_semantics=("parallel",)),
    )(x, params["se_w1"], params["se_w2"], params["w7"],
      params["w_comb"], params["b_comb"])

    return out[:B] if Bp != B else out


def fold_params(raw, HW):
    # W_comb = diag(s7) @ W1^T @ diag(s1) @ Wfc^T ; b_comb folds BN biases + fc bias.
    s7 = raw["bn7_scale"].reshape(-1)
    s1 = raw["bn1_scale"].reshape(-1)
    w1_scaled = (s7[:, None] * raw["w1_t"]) * s1[None, :]          # (C, C)
    w_comb = w1_scaled @ raw["fc_w_t"]                             # (C, OUT)
    b_comb = ((raw["bn7_bias"] @ raw["w1_t"]) * raw["bn1_scale"]
              + raw["bn1_bias"]) @ raw["fc_w_t"] + raw["fc_b"]     # (1, OUT)
    return {
        "se_w1": raw["se_w1_t"] / HW,   # fold 1/HW of the avg-pool into SE fc1
        "se_w2": raw["se_w2_t"],
        "w7": raw["w7"],                # (C, HW) depthwise 4x4 weight
        "w_comb": w_comb,
        "b_comb": b_comb,
    }


def make_params(key, C, reduction, HW, OUT):
    CR = C // reduction
    ks = jax.random.split(key, 13)
    eps = 1e-5

    def bn_fold(kg, kb, km, kv, n):
        gamma = 1.0 + 0.1 * jax.random.normal(kg, (n,), jnp.float32)
        beta = 0.1 * jax.random.normal(kb, (n,), jnp.float32)
        mean = 0.1 * jax.random.normal(km, (n,), jnp.float32)
        var = jnp.abs(jax.random.normal(kv, (n,), jnp.float32)) + 0.5
        scale = gamma / jnp.sqrt(var + eps)
        bias = beta - mean * scale
        return scale.reshape(1, n), bias.reshape(1, n)

    # SE: fc1 (CR, C, 1, 1), fc2 (C, CR, 1, 1) -- stored pre-transposed for x @ W
    se_w1 = 0.1 * jax.random.normal(ks[0], (CR, C), jnp.float32)
    se_w2 = 0.1 * jax.random.normal(ks[1], (C, CR), jnp.float32)
    # linear7: depthwise conv weight (C, 1, 4, 4) -> (C, HW)
    w7 = 0.1 * jax.random.normal(ks[2], (C, HW), jnp.float32)
    bn7_scale, bn7_bias = bn_fold(ks[3], ks[4], ks[5], ks[6], C)
    # linear1: 1x1 conv weight (C, C, 1, 1)
    w1 = 0.1 * jax.random.normal(ks[7], (C, C), jnp.float32)
    bn1_scale, bn1_bias = bn_fold(ks[8], ks[9], ks[10], ks[11], C)
    # fc: Linear(C, OUT)
    fc_w = 0.1 * jax.random.normal(ks[12], (OUT, C), jnp.float32)
    fc_b = 0.01 * jnp.arange(OUT, dtype=jnp.float32).reshape(1, OUT)

    raw = {
        "se_w1_t": se_w1.T, "se_w2_t": se_w2.T,
        "w7": w7,
        "bn7_scale": bn7_scale, "bn7_bias": bn7_bias,
        "w1_t": w1.T,
        "bn1_scale": bn1_scale, "bn1_bias": bn1_bias,
        "fc_w_t": fc_w.T, "fc_b": fc_b,
    }
    return raw, fold_params(raw, HW)


def reference(x_nchw, raw):
    # pure-JAX reference of the *original* (un-folded) head semantics
    B, C, H, W = x_nchw.shape
    x = x_nchw.reshape(B, C, H * W)                        # (B, C, HW)
    pooled = jnp.mean(x, axis=2)                           # AdaptiveAvgPool2d(1)
    h = jnp.maximum(pooled @ raw["se_w1_t"], 0.0)
    s = jax.nn.sigmoid(h @ raw["se_w2_t"])
    xs = x * s[:, :, None]                                 # SE: input * attention
    y = jnp.sum(xs * raw["w7"][None], axis=2)              # depthwise 4x4 -> (B, C)
    y = y * raw["bn7_scale"] + raw["bn7_bias"]
    y = y @ raw["w1_t"]
    y = y * raw["bn1_scale"] + raw["bn1_bias"]
    return y @ raw["fc_w_t"] + raw["fc_b"]


if __name__ == "__main__":
    # Small shapes consistent with the module's head:
    #   base_net feature map (B, C, 4, 4); linear7's 4x4 kernel collapses it to 1x1.
    B, C, H, W = 2, 64, 4, 4
    REDUCTION = 8
    NUM_PTS = 8           # fc outputs 2 * NUM_PTS
    OUT = 2 * NUM_PTS

    key = jax.random.PRNGKey(0)
    kx, kp = jax.random.split(key)
    x = jax.random.normal(kx, (B, C, H, W), jnp.float32)
    raw, params = make_params(kp, C, REDUCTION, H * W, OUT)

    out = jax.block_until_ready(resnext_steroid_head(x, params))
    ref = reference(x, raw)

    assert out.shape == (B, OUT), out.shape
    assert jnp.allclose(out, ref, atol=1e-4, rtol=1e-4), float(jnp.max(jnp.abs(out - ref)))
    print("KERNEL_OK")
</pallas_src>

<mosaic_0001>
module attributes {stable_mosaic.version = 11 : i64} {
  func.func @head_kernel(%arg0: i32, %arg1: memref<2x64x16xf32, #tpu.memory_space<vmem>>, %arg2: memref<64x8xf32, #tpu.memory_space<vmem>>, %arg3: memref<8x64xf32, #tpu.memory_space<vmem>>, %arg4: memref<64x16xf32, #tpu.memory_space<vmem>>, %arg5: memref<64x16xf32, #tpu.memory_space<vmem>>, %arg6: memref<1x16xf32, #tpu.memory_space<vmem>>, %arg7: memref<2x16xf32, #tpu.memory_space<vmem>>) attributes {dimension_semantics = [#tpu.dimension_semantics<parallel>], iteration_bounds = array<i64: 1>, scalar_prefetch = 0 : i64, scratch_operands = 0 : i64, tpu.core_type = #tpu.core_type<tc>, window_params = [{transform_indices = @transform_0, window_bounds = array<i64: 2, 64, 16>}, {pipeline_mode = #tpu.pipeline_mode<synchronous>, transform_indices = @transform_1, window_bounds = array<i64: 64, 8>}, {pipeline_mode = #tpu.pipeline_mode<synchronous>, transform_indices = @transform_2, window_bounds = array<i64: 8, 64>}, {pipeline_mode = #tpu.pipeline_mode<synchronous>, transform_indices = @transform_3, window_bounds = array<i64: 64, 16>}, {pipeline_mode = #tpu.pipeline_mode<synchronous>, transform_indices = @transform_4, window_bounds = array<i64: 64, 16>}, {pipeline_mode = #tpu.pipeline_mode<synchronous>, transform_indices = @transform_5, window_bounds = array<i64: 1, 16>}, {transform_indices = @transform_6, window_bounds = array<i64: 2, 16>}]} {
    %c0 = arith.constant 0 : index
    %c0_0 = arith.constant 0 : index
    %c0_1 = arith.constant 0 : index
    %0 = vector.load %arg1[%c0, %c0_0, %c0_1] : memref<2x64x16xf32, #tpu.memory_space<vmem>>, vector<2x64x16xf32>
    %cst = arith.constant dense<0.000000e+00> : vector<2x64xf32>
    %1 = vector.multi_reduction <add>, %0, %cst [2] : vector<2x64x16xf32> to vector<2x64xf32>
    %c0_2 = arith.constant 0 : index
    %c0_3 = arith.constant 0 : index
    %2 = vector.load %arg4[%c0_2, %c0_3] : memref<64x16xf32, #tpu.memory_space<vmem>>, vector<64x16xf32>
    %3 = vector.shape_cast %2 : vector<64x16xf32> to vector<1x64x16xf32>
    %4 = vector.broadcast %3 : vector<1x64x16xf32> to vector<2x64x16xf32>
    %5 = arith.mulf %0, %4 : vector<2x64x16xf32>
    %cst_4 = arith.constant dense<0.000000e+00> : vector<2x64xf32>
    %6 = vector.multi_reduction <add>, %5, %cst_4 [2] : vector<2x64x16xf32> to vector<2x64xf32>
    %c0_5 = arith.constant 0 : index
    %c0_6 = arith.constant 0 : index
    %7 = vector.load %arg2[%c0_5, %c0_6] : memref<64x8xf32, #tpu.memory_space<vmem>>, vector<64x8xf32>
    %cst_7 = arith.constant dense<0.000000e+00> : vector<2x8xf32>
    %8 = tpu.matmul %1, %7, %cst_7 {dimension_numbers = #tpu.dot_dimension_numbers<[1], [0], [0], [1], [0, 0, 1, 1], [], []>} : vector<2x64xf32>, vector<64x8xf32>, vector<2x8xf32> -> vector<2x8xf32>
    %cst_8 = arith.constant 0.000000e+00 : f32
    %9 = vector.broadcast %cst_8 : f32 to vector<2x8xf32>
    %10 = arith.maximumf %8, %9 : vector<2x8xf32>
    %c0_9 = arith.constant 0 : index
    %c0_10 = arith.constant 0 : index
    %11 = vector.load %arg3[%c0_9, %c0_10] : memref<8x64xf32, #tpu.memory_space<vmem>>, vector<8x64xf32>
    %cst_11 = arith.constant dense<0.000000e+00> : vector<2x64xf32>
    %12 = tpu.matmul %10, %11, %cst_11 {dimension_numbers = #tpu.dot_dimension_numbers<[1], [0], [0], [1], [0, 0, 1, 1], [], []>} : vector<2x8xf32>, vector<8x64xf32>, vector<2x64xf32> -> vector<2x64xf32>
    %13 = arith.negf %12 : vector<2x64xf32>
    %14 = math.exp %13 : vector<2x64xf32>
    %cst_12 = arith.constant 1.000000e+00 : f32
    %15 = vector.broadcast %cst_12 : f32 to vector<2x64xf32>
    %16 = arith.addf %15, %14 : vector<2x64xf32>
    %17 = arith.divf %15, %16 : vector<2x64xf32>
    %18 = arith.mulf %6, %17 : vector<2x64xf32>
    %c0_13 = arith.constant 0 : index
    %c0_14 = arith.constant 0 : index
    %19 = vector.load %arg5[%c0_13, %c0_14] : memref<64x16xf32, #tpu.memory_space<vmem>>, vector<64x16xf32>
    %cst_15 = arith.constant dense<0.000000e+00> : vector<2x16xf32>
    %20 = tpu.matmul %18, %19, %cst_15 {dimension_numbers = #tpu.dot_dimension_numbers<[1], [0], [0], [1], [0, 0, 1, 1], [], []>} : vector<2x64xf32>, vector<64x16xf32>, vector<2x16xf32> -> vector<2x16xf32>
    %c0_16 = arith.constant 0 : index
    %c0_17 = arith.constant 0 : index
    %21 = vector.load %arg6[%c0_16, %c0_17] : memref<1x16xf32, #tpu.memory_space<vmem>>, vector<1x16xf32>
    %22 = vector.broadcast %21 : vector<1x16xf32> to vector<2x16xf32>
    %23 = arith.addf %20, %22 : vector<2x16xf32>
    %c0_18 = arith.constant 0 : index
    %c0_19 = arith.constant 0 : index
    %24 = vector.load %arg7[%c0_18, %c0_19] : memref<2x16xf32, #tpu.memory_space<vmem>>, vector<2x16xf32>
    tpu.vector_store %arg7[%c0_18, %c0_19], %23 {strides = array<i32>} : memref<2x16xf32, #tpu.memory_space<vmem>>, vector<2x16xf32>,
    return
  }
  func.func @transform_0(%arg0: i32) -> (i32, i32, i32) {
    %c0_i32 = arith.constant 0 : i32
    %c0_i32_0 = arith.constant 0 : i32
    %c0_i32_1 = arith.constant 0 : i32
    return %arg0, %c0_i32, %c0_i32_0 : i32, i32, i32
  }
  func.func @transform_1(%arg0: i32) -> (i32, i32) {
    %c0_i32 = arith.constant 0 : i32
    %c0_i32_0 = arith.constant 0 : i32
    %c0_i32_1 = arith.constant 0 : i32
    return %c0_i32, %c0_i32_0 : i32, i32
  }
  func.func @transform_2(%arg0: i32) -> (i32, i32) {
    %c0_i32 = arith.constant 0 : i32
    %c0_i32_0 = arith.constant 0 : i32
    %c0_i32_1 = arith.constant 0 : i32
    return %c0_i32, %c0_i32_0 : i32, i32
  }
  func.func @transform_3(%arg0: i32) -> (i32, i32) {
    %c0_i32 = arith.constant 0 : i32
    %c0_i32_0 = arith.constant 0 : i32
    %c0_i32_1 = arith.constant 0 : i32
    return %c0_i32, %c0_i32_0 : i32, i32
  }
  func.func @transform_4(%arg0: i32) -> (i32, i32) {
    %c0_i32 = arith.constant 0 : i32
    %c0_i32_0 = arith.constant 0 : i32
    %c0_i32_1 = arith.constant 0 : i32
    return %c0_i32, %c0_i32_0 : i32, i32
  }
  func.func @transform_5(%arg0: i32) -> (i32, i32) {
    %c0_i32 = arith.constant 0 : i32
    %c0_i32_0 = arith.constant 0 : i32
    %c0_i32_1 = arith.constant 0 : i32
    return %c0_i32, %c0_i32_0 : i32, i32
  }
  func.func @transform_6(%arg0: i32) -> (i32, i32) {
    %c0_i32 = arith.constant 0 : i32
    %c0_i32_0 = arith.constant 0 : i32
    return %arg0, %c0_i32 : i32, i32
  }
}

</mosaic_0001>

<llo_original>
// kernel: tpu_custom_call.1
$region0: #{tpu_custom_call.1}
  #allocation0 [shape = 'u32[]', space=smem, size = 0x4, offset = 0x4, fixed_abs, tag = 'smem constant byte address 0x4 - core index']
  #allocation1 [shape = 'u32[144,128]{1,0:T(1,128)}', space=vmem, size = 0x12000, scoped, tag = 'internal scratch']
  %s0 = inlined_call_operand.vmem [shape: f32[2,64,16], index: 0, kind: input, shape index: {}]
  %s1 = inlined_call_operand.vmem [shape: f32[64,8], index: 1, kind: input, shape index: {}]
  %s2 = inlined_call_operand.vmem [shape: f32[8,64], index: 2, kind: input, shape index: {}]
  %s3 = inlined_call_operand.vmem [shape: f32[64,16], index: 3, kind: input, shape index: {}]
  %s4 = inlined_call_operand.vmem [shape: f32[64,16], index: 4, kind: input, shape index: {}]
  %s5 = inlined_call_operand.vmem [shape: f32[1,16], index: 5, kind: input, shape index: {}]
  %s6 = inlined_call_operand.hbm [shape: f32[2,16], index: 6, kind: output, shape index: {}]
  %s7 = sld [smem:[#allocation0]]
  $region34: #{tpu_custom_call.1} parent=0
    _
  %s9 = ssub.s32 1, %s7
  %s10 = scalar_select 0, %s9, %s7
  $region1: #{tpu_custom_call.1} parent=0
    #allocation2 [shape = 'u8[1024]{0}', space=vmem, size = 0x400, scoped, tag = 'output window, operand 0, single buffered']
    #allocation3 [shape = 's32[1]{0}', space=sflag, size = 0x4, scoped, tag = 'scoped memory for tpu_custom_call.1']
    %11 = vsyncpa [#allocation3], 0
    // Predicated region
    $region2: #{tpu_custom_call.1} parent=1 // pred_check
      _
    $region3: #{tpu_custom_call.1} parent=1 // pred_check_branch
      %13 = sbr.rel (0) target = $region5
    $region4: #{tpu_custom_call.1} parent=1 // pred_region
      _
    $region5: #{tpu_custom_call.1} parent=1 // pred_fallthru
      _
    // Predicated region
    $region6: #{tpu_custom_call.1} parent=1 // pred_check
      _
    $region7: #{tpu_custom_call.1} parent=1 // pred_check_branch
      %15 = sbr.rel (0) target = $region9
    $region8: #{tpu_custom_call.1} parent=1 // pred_region
      _
    $region9: #{tpu_custom_call.1} parent=1 // pred_fallthru
      _
    // Predicated region
    $region10: #{tpu_custom_call.1} parent=1 // pred_check
      _
    $region11: #{tpu_custom_call.1} parent=1 // pred_check_branch
      %17 = sbr.rel (0) target = $region13
    $region12: #{tpu_custom_call.1} parent=1 // pred_region
      _
    $region13: #{tpu_custom_call.1} parent=1 // pred_fallthru
      _
    // Predicated region
    $region14: #{tpu_custom_call.1} parent=1 // pred_check
      _
    $region15: #{tpu_custom_call.1} parent=1 // pred_check_branch
      %19 = sbr.rel (0) target = $region17
    $region16: #{tpu_custom_call.1} parent=1 // pred_region
      _
    $region17: #{tpu_custom_call.1} parent=1 // pred_fallthru
      _
    // Predicated region
    $region18: #{tpu_custom_call.1} parent=1 // pred_check
      _
    $region19: #{tpu_custom_call.1} parent=1 // pred_check_branch
      %21 = sbr.rel (0) target = $region21
    $region20: #{tpu_custom_call.1} parent=1 // pred_region
      _
    $region21: #{tpu_custom_call.1} parent=1 // pred_fallthru
      _
    // Predicated region
    $region22: #{tpu_custom_call.1} parent=1 // pred_check
      _
    $region23: #{tpu_custom_call.1} parent=1 // pred_check_branch
      %23 = sbr.rel (0) target = $region25
    $region24: #{tpu_custom_call.1} parent=1 // pred_region
      _
    $region25: #{tpu_custom_call.1} parent=1 // pred_fallthru
      _
    %v24 = vld [vmem:[%s0] sm:$0xff]
    %v25 = vld [vmem:[%s0 + $0x8] sm:$0xff]
    %v26 = vld [vmem:[%s0 + $0x10] sm:$0xff]
    %v27 = vld [vmem:[%s0 + $0x18] sm:$0xff]
    %v28 = vld [vmem:[%s0 + $0x20] sm:$0xff]
    %v29 = vld [vmem:[%s0 + $0x28] sm:$0xff]
    %v30 = vld [vmem:[%s0 + $0x30] sm:$0xff]
    %v31 = vld [vmem:[%s0 + $0x38] sm:$0xff]
    %v32 = vld [vmem:[%s0 + $0x40] sm:$0xff]
    %v33 = vld [vmem:[%s0 + $0x48] sm:$0xff]
    %v34 = vld [vmem:[%s0 + $0x50] sm:$0xff]
    %v35 = vld [vmem:[%s0 + $0x58] sm:$0xff]
    %v36 = vld [vmem:[%s0 + $0x60] sm:$0xff]
    %v37 = vld [vmem:[%s0 + $0x68] sm:$0xff]
    %v38 = vld [vmem:[%s0 + $0x70] sm:$0xff]
    %v39 = vld [vmem:[%s0 + $0x78] sm:$0xff]
    %vm40 = vcmask 130048
    %v41 = vsel %vm40, %v24, 0.0
    %42 = vadd.xlane.f32.xlu0 %v41
    %v43 = vpop.xlane.xlu0 %42
    %v44 = vsel %vm40, %v25, 0.0
    %45 = vadd.xlane.f32.xlu0 %v44
    %v46 = vpop.xlane.xlu0 %45
    %v47 = vsel %vm40, %v26, 0.0
    %48 = vadd.xlane.f32.xlu0 %v47
    %v49 = vpop.xlane.xlu0 %48
    %v50 = vsel %vm40, %v27, 0.0
    %51 = vadd.xlane.f32.xlu0 %v50
    %v52 = vpop.xlane.xlu0 %51
    %v53 = vsel %vm40, %v28, 0.0
    %54 = vadd.xlane.f32.xlu0 %v53
    %v55 = vpop.xlane.xlu0 %54
    %v56 = vsel %vm40, %v29, 0.0
    %57 = vadd.xlane.f32.xlu0 %v56
    %v58 = vpop.xlane.xlu0 %57
    %v59 = vsel %vm40, %v30, 0.0
    %60 = vadd.xlane.f32.xlu0 %v59
    %v61 = vpop.xlane.xlu0 %60
    %v62 = vsel %vm40, %v31, 0.0
    %63 = vadd.xlane.f32.xlu0 %v62
    %v64 = vpop.xlane.xlu0 %63
    %v65 = vsel %vm40, %v32, 0.0
    %66 = vadd.xlane.f32.xlu0 %v65
    %v67 = vpop.xlane.xlu0 %66
    %v68 = vsel %vm40, %v33, 0.0
    %69 = vadd.xlane.f32.xlu0 %v68
    %v70 = vpop.xlane.xlu0 %69
    %v71 = vsel %vm40, %v34, 0.0
    %72 = vadd.xlane.f32.xlu0 %v71
    %v73 = vpop.xlane.xlu0 %72
    %v74 = vsel %vm40, %v35, 0.0
    %75 = vadd.xlane.f32.xlu0 %v74
    %v76 = vpop.xlane.xlu0 %75
    %v77 = vsel %vm40, %v36, 0.0
    %78 = vadd.xlane.f32.xlu0 %v77
    %v79 = vpop.xlane.xlu0 %78
    %v80 = vsel %vm40, %v37, 0.0
    %81 = vadd.xlane.f32.xlu0 %v80
    %v82 = vpop.xlane.xlu0 %81
    %v83 = vsel %vm40, %v38, 0.0
    %84 = vadd.xlane.f32.xlu0 %v83
    %v85 = vpop.xlane.xlu0 %84
    %v86 = vsel %vm40, %v39, 0.0
    %87 = vadd.xlane.f32.xlu0 %v86
    %v88 = vpop.xlane.xlu0 %87
    %v89 = vld [vmem:[%s3] sm:$0xff]
    %v90 = vld [vmem:[%s3 + $0x8] sm:$0xff]
    %v91 = vld [vmem:[%s3 + $0x10] sm:$0xff]
    %v92 = vld [vmem:[%s3 + $0x18] sm:$0xff]
    %v93 = vld [vmem:[%s3 + $0x20] sm:$0xff]
    %v94 = vld [vmem:[%s3 + $0x28] sm:$0xff]
    %v95 = vld [vmem:[%s3 + $0x30] sm:$0xff]
    %v96 = vld [vmem:[%s3 + $0x38] sm:$0xff]
    %v97 = vmul.f32 %v24, %v89
    %v98 = vmul.f32 %v25, %v90
    %v99 = vmul.f32 %v26, %v91
    %v100 = vmul.f32 %v27, %v92
    %v101 = vmul.f32 %v28, %v93
    %v102 = vmul.f32 %v29, %v94
    %v103 = vmul.f32 %v30, %v95
    %v104 = vmul.f32 %v31, %v96
    %v105 = vmul.f32 %v32, %v89
    %v106 = vmul.f32 %v33, %v90
    %v107 = vmul.f32 %v34, %v91
    %v108 = vmul.f32 %v35, %v92
    %v109 = vmul.f32 %v36, %v93
    %v110 = vmul.f32 %v37, %v94
    %v111 = vmul.f32 %v38, %v95
    %v112 = vmul.f32 %v39, %v96
    %v113 = vsel %vm40, %v97, 0.0
    %114 = vadd.xlane.f32.xlu0 %v113
    %v115 = vpop.xlane.xlu0 %114
    %v116 = vsel %vm40, %v98, 0.0
    %117 = vadd.xlane.f32.xlu0 %v116
    %v118 = vpop.xlane.xlu0 %117
    %v119 = vsel %vm40, %v99, 0.0
    %120 = vadd.xlane.f32.xlu0 %v119
    %v121 = vpop.xlane.xlu0 %120
    %v122 = vsel %vm40, %v100, 0.0
    %123 = vadd.xlane.f32.xlu0 %v122
    %v124 = vpop.xlane.xlu0 %123
    %v125 = vsel %vm40, %v101, 0.0
    %126 = vadd.xlane.f32.xlu0 %v125
    %v127 = vpop.xlane.xlu0 %126
    %v128 = vsel %vm40, %v102, 0.0
    %129 = vadd.xlane.f32.xlu0 %v128
    %v130 = vpop.xlane.xlu0 %129
    %v131 = vsel %vm40, %v103, 0.0
    %132 = vadd.xlane.f32.xlu0 %v131
    %v133 = vpop.xlane.xlu0 %132
    %v134 = vsel %vm40, %v104, 0.0
    %135 = vadd.xlane.f32.xlu0 %v134
    %v136 = vpop.xlane.xlu0 %135
    %v137 = vsel %vm40, %v105, 0.0
    %138 = vadd.xlane.f32.xlu0 %v137
    %v139 = vpop.xlane.xlu0 %138
    %v140 = vsel %vm40, %v106, 0.0
    %141 = vadd.xlane.f32.xlu0 %v140
    %v142 = vpop.xlane.xlu0 %141
    %v143 = vsel %vm40, %v107, 0.0
    %144 = vadd.xlane.f32.xlu0 %v143
    %v145 = vpop.xlane.xlu0 %144
    %v146 = vsel %vm40, %v108, 0.0
    %147 = vadd.xlane.f32.xlu0 %v146
    %v148 = vpop.xlane.xlu0 %147
    %v149 = vsel %vm40, %v109, 0.0
    %150 = vadd.xlane.f32.xlu0 %v149
    %v151 = vpop.xlane.xlu0 %150
    %v152 = vsel %vm40, %v110, 0.0
    %153 = vadd.xlane.f32.xlu0 %v152
    %v154 = vpop.xlane.xlu0 %153
    %v155 = vsel %vm40, %v111, 0.0
    %156 = vadd.xlane.f32.xlu0 %v155
    %v157 = vpop.xlane.xlu0 %156
    %v158 = vsel %vm40, %v112, 0.0
    %159 = vadd.xlane.f32.xlu0 %v158
    %v160 = vpop.xlane.xlu0 %159
    %v161 = vld [vmem:[%s1] sm:$0xff]
    %v162 = vld [vmem:[%s1 + $0x8] sm:$0xff]
    %v163 = vld [vmem:[%s1 + $0x10] sm:$0xff]
    %v164 = vld [vmem:[%s1 + $0x18] sm:$0xff]
    %v165 = vld [vmem:[%s1 + $0x20] sm:$0xff]
    %v166 = vld [vmem:[%s1 + $0x28] sm:$0xff]
    %v167 = vld [vmem:[%s1 + $0x30] sm:$0xff]
    %v168 = vld [vmem:[%s1 + $0x38] sm:$0xff]
    %v185 = vlaneseq
    %v186 = vand.u32 %v185, 127
    %v187 = vlaneseq
    %v188 = vshrl.u32 %v187, 7
    %v189 = vsub.s32 %v186, %v188
    %v190 = vrot.slane %v43, %v189
    %v191 = vadd.s32 %v186, 4294967288
    %v192 = vlaneseq
    %v193 = vshrl.u32 %v192, 7
    %v194 = vsub.s32 %v191, %v193
    %v195 = vrot.slane %v46, %v194
    %vm196 = vcmask 130112
    %v197 = vsel %vm196, %v195, %v190
    %v198 = vadd.s32 %v186, 4294967280
    %v199 = vlaneseq
    %v200 = vshrl.u32 %v199, 7
    %v201 = vsub.s32 %v198, %v200
    %v202 = vrot.slane %v49, %v201
    %vm203 = vcmask 195712
    %v204 = vsel %vm203, %v202, %v197
    %v205 = vadd.s32 %v186, 4294967272
    %v206 = vlaneseq
    %v207 = vshrl.u32 %v206, 7
    %v208 = vsub.s32 %v205, %v207
    %v209 = vrot.slane %v52, %v208
    %vm210 = vcmask 261312
    %v211 = vsel %vm210, %v209, %v204
    %v212 = vadd.s32 %v186, 4294967264
    %v213 = vlaneseq
    %v214 = vshrl.u32 %v213, 7
    %v215 = vsub.s32 %v212, %v214
    %v216 = vrot.slane %v55, %v215
    %vm217 = vcmask 326912
    %v218 = vsel %vm217, %v216, %v211
    %v219 = vadd.s32 %v186, 4294967256
    %v220 = vlaneseq
    %v221 = vshrl.u32 %v220, 7
    %v222 = vsub.s32 %v219, %v221
    %v223 = vrot.slane %v58, %v222
    %vm224 = vcmask 392512
    %v225 = vsel %vm224, %v223, %v218
    %v226 = vadd.s32 %v186, 4294967248
    %v227 = vlaneseq
    %v228 = vshrl.u32 %v227, 7
    %v229 = vsub.s32 %v226, %v228
    %v230 = vrot.slane %v61, %v229
    %vm231 = vcmask 458112
    %v232 = vsel %vm231, %v230, %v225
    %v233 = vadd.s32 %v186, 4294967240
    %v234 = vlaneseq
    %v235 = vshrl.u32 %v234, 7
    %v236 = vsub.s32 %v233, %v235
    %v237 = vrot.slane %v64, %v236
    %vm238 = vcmask 523712
    %v239 = vsel %vm238, %v237, %v232
    %v240 = vlaneseq
    %v241 = vshrl.u32 %v240, 7
    %v242 = vsub.s32 %v186, %v241
    %v243 = vrot.slane %v67, %v242
    %v244 = vlaneseq
    %v245 = vshrl.u32 %v244, 7
    %v246 = vsub.s32 %v191, %v245
    %v247 = vrot.slane %v70, %v246
    %v248 = vsel %vm196, %v247, %v243
    %v249 = vlaneseq
    %v250 = vshrl.u32 %v249, 7
    %v251 = vsub.s32 %v198, %v250
    %v252 = vrot.slane %v73, %v251
    %v253 = vsel %vm203, %v252, %v248
    %v254 = vlaneseq
    %v255 = vshrl.u32 %v254, 7
    %v256 = vsub.s32 %v205, %v255
    %v257 = vrot.slane %v76, %v256
    %v258 = vsel %vm210, %v257, %v253
    %v259 = vlaneseq
    %v260 = vshrl.u32 %v259, 7
    %v261 = vsub.s32 %v212, %v260
    %v262 = vrot.slane %v79, %v261
    %v263 = vsel %vm217, %v262, %v258
    %v264 = vlaneseq
    %v265 = vshrl.u32 %v264, 7
    %v266 = vsub.s32 %v219, %v265
    %v267 = vrot.slane %v82, %v266
    %v268 = vsel %vm224, %v267, %v263
    %v269 = vlaneseq
    %v270 = vshrl.u32 %v269, 7
    %v271 = vsub.s32 %v226, %v270
    %v272 = vrot.slane %v85, %v271
    %v273 = vsel %vm231, %v272, %v268
    %v274 = vlaneseq
    %v275 = vshrl.u32 %v274, 7
    %v276 = vsub.s32 %v233, %v275
    %v277 = vrot.slane %v88, %v276
    %v278 = vsel %vm238, %v277, %v273
    %vm279 = vcmask 1041409
    %v280 = vsel %vm279, %v278, %v239
    %vm281 = vcmask 523264
    %v282 = vsel %vm281, %v280, 0
    %284 = vmatprep.subr.mxu0 0.0
    %285 = vmatpush1.msra.mxu0 0.0
    %286 = vmatprep.subr.mxu0 0.0
    %287 = vmatpush1.msra.mxu0 0.0
    %288 = vmatprep.subr.mxu0 0.0
    %289 = vmatpush1.msra.mxu0 0.0
    %290 = vmatprep.subr.mxu0 0.0
    %291 = vmatpush1.msra.mxu0 0.0
    %292 = vmatprep.subr.mxu0 0.0
    %293 = vmatpush1.msra.mxu0 0.0
    %294 = vmatprep.subr.mxu0 0.0
    %295 = vmatpush1.msra.mxu0 0.0
    %296 = vmatprep.subr.mxu0 0.0
    %297 = vmatpush1.msra.mxu0 0.0
    %298 = vmatprep.subr.mxu0 0.0
    %299 = vmatpush1.msra.mxu0 0.0
    %300 = vmatprep.subr.mxu0 0.0
    %301 = vmatpush1.msra.mxu0 %v168
    %302 = vmatprep.subr.mxu0 0.0
    %303 = vmatpush1.msra.mxu0 %v167
    %304 = vmatprep.subr.mxu0 0.0
    %305 = vmatpush1.msra.mxu0 %v166
    %306 = vmatprep.subr.mxu0 0.0
    %307 = vmatpush1.msra.mxu0 %v165
    %308 = vmatprep.subr.mxu0 0.0
    %309 = vmatpush1.msra.mxu0 %v164
    %310 = vmatprep.subr.mxu0 0.0
    %311 = vmatpush1.msra.mxu0 %v163
    %312 = vmatprep.subr.mxu0 0.0
    %313 = vmatpush1.msra.mxu0 %v162
    %314 = vmatprep.subr.mxu0 0.0
    %315 = vmatpush1.msra.mxu0 %v161
    %316 = vmatprep.subr.mxu0 0.0
    %317 = vmatpush2.msra.mxu0 0.0
    %318 = vmatprep.subr.mxu0 0.0
    %319 = vmatpush2.msra.mxu0 0.0
    %320 = vmatprep.subr.mxu0 0.0
    %321 = vmatpush2.msra.mxu0 0.0
    %322 = vmatprep.subr.mxu0 0.0
    %323 = vmatpush2.msra.mxu0 0.0
    %324 = vmatprep.subr.mxu0 0.0
    %325 = vmatpush2.msra.mxu0 0.0
    %326 = vmatprep.subr.mxu0 0.0
    %327 = vmatpush2.msra.mxu0 0.0
    %328 = vmatprep.subr.mxu0 0.0
    %329 = vmatpush2.msra.mxu0 0.0
    %330 = vmatprep.subr.mxu0 0.0
    %331 = vmatpush2.msra.mxu0 0.0
    %332 = vmatprep.subr.mxu0 0.0
    %333 = vmatpush2.msra.mxu0 0.0
    %334 = vmatprep.subr.mxu0 0.0
    %335 = vmatpush2.msra.mxu0 0.0
    %336 = vmatprep.subr.mxu0 0.0
    %337 = vmatpush2.msra.mxu0 0.0
    %338 = vmatprep.subr.mxu0 0.0
    %339 = vmatpush2.msra.mxu0 0.0
    %340 = vmatprep.subr.mxu0 0.0
    %341 = vmatpush2.msra.mxu0 0.0
    %342 = vmatprep.subr.mxu0 0.0
    %343 = vmatpush2.msra.mxu0 0.0
    %344 = vmatprep.subr.mxu0 0.0
    %345 = vmatpush2.msra.mxu0 0.0
    %346 = vmatprep.subr.mxu0 0.0
    %347 = vmatpush2.msra.mxu0 0.0
    %348 = vmatprep.mubr.f32.mxu0 0.0
    %349 = vmatmul.mubr.f32.gmra.mxu0 %v282
    %v350 = vpop.f32.mrf.mxu0
    %v351 = vadd.f32 0.0, %v350
    %v352 = vpop.f32.mrf.mxu0
    %353 = vdwg.mxu0
    %v354 = vmax.f32 %v351, 0.0
    %v355 = vld [vmem:[%s2] sm:$0xff]
    %vm356 = vcmask 64512
    %v358 = vsel %vm356, %v354, 0
    %360 = vmatprep.subr.mxu0 0.0
    %361 = vmatpush1.msra.mxu0 0.0
    %362 = vmatprep.subr.mxu0 0.0
    %363 = vmatpush1.msra.mxu0 0.0
    %364 = vmatprep.subr.mxu0 0.0
    %365 = vmatpush1.msra.mxu0 0.0
    %366 = vmatprep.subr.mxu0 0.0
    %367 = vmatpush1.msra.mxu0 0.0
    %368 = vmatprep.subr.mxu0 0.0
    %369 = vmatpush1.msra.mxu0 0.0
    %370 = vmatprep.subr.mxu0 0.0
    %371 = vmatpush1.msra.mxu0 0.0
    %372 = vmatprep.subr.mxu0 0.0
    %373 = vmatpush1.msra.mxu0 0.0
    %374 = vmatprep.subr.mxu0 0.0
    %375 = vmatpush1.msra.mxu0 0.0
    %376 = vmatprep.subr.mxu0 0.0
    %377 = vmatpush1.msra.mxu0 0.0
    %378 = vmatprep.subr.mxu0 0.0
    %379 = vmatpush1.msra.mxu0 0.0
    %380 = vmatprep.subr.mxu0 0.0
    %381 = vmatpush1.msra.mxu0 0.0
    %382 = vmatprep.subr.mxu0 0.0
    %383 = vmatpush1.msra.mxu0 0.0
    %384 = vmatprep.subr.mxu0 0.0
    %385 = vmatpush1.msra.mxu0 0.0
    %386 = vmatprep.subr.mxu0 0.0
    %387 = vmatpush1.msra.mxu0 0.0
    %388 = vmatprep.subr.mxu0 0.0
    %389 = vmatpush1.msra.mxu0 0.0
    %390 = vmatprep.subr.mxu0 0.0
    %391 = vmatpush1.msra.mxu0 %v355
    %392 = vmatprep.subr.mxu0 0.0
    %393 = vmatpush2.msra.mxu0 0.0
    %394 = vmatprep.subr.mxu0 0.0
    %395 = vmatpush2.msra.mxu0 0.0
    %396 = vmatprep.subr.mxu0 0.0
    %397 = vmatpush2.msra.mxu0 0.0
    %398 = vmatprep.subr.mxu0 0.0
    %399 = vmatpush2.msra.mxu0 0.0
    %400 = vmatprep.subr.mxu0 0.0
    %401 = vmatpush2.msra.mxu0 0.0
    %402 = vmatprep.subr.mxu0 0.0
    %403 = vmatpush2.msra.mxu0 0.0
    %404 = vmatprep.subr.mxu0 0.0
    %405 = vmatpush2.msra.mxu0 0.0
    %406 = vmatprep.subr.mxu0 0.0
    %407 = vmatpush2.msra.mxu0 0.0
    %408 = vmatprep.subr.mxu0 0.0
    %409 = vmatpush2.msra.mxu0 0.0
    %410 = vmatprep.subr.mxu0 0.0
    %411 = vmatpush2.msra.mxu0 0.0
    %412 = vmatprep.subr.mxu0 0.0
    %413 = vmatpush2.msra.mxu0 0.0
    %414 = vmatprep.subr.mxu0 0.0
    %415 = vmatpush2.msra.mxu0 0.0
    %416 = vmatprep.subr.mxu0 0.0
    %417 = vmatpush2.msra.mxu0 0.0
    %418 = vmatprep.subr.mxu0 0.0
    %419 = vmatpush2.msra.mxu0 0.0
    %420 = vmatprep.subr.mxu0 0.0
    %421 = vmatpush2.msra.mxu0 0.0
    %422 = vmatprep.subr.mxu0 0.0
    %423 = vmatpush2.msra.mxu0 0.0
    %424 = vmatprep.mubr.f32.mxu0 0.0
    %425 = vmatmul.mubr.f32.gmra.mxu0 %v358
    %v426 = vpop.f32.mrf.mxu0
    %v427 = vadd.f32 0.0, %v426
    %v428 = vpop.f32.mrf.mxu0
    %429 = vdwg.mxu0
    %v430 = vxor.u32 %v427, 2147483648
    %v431 = vmul.f32 %v430, 1.442695
    %v432 = vpow.pop %v431
    %v433 = vadd.f32 %v432, 1.0
    %v434 = vrcp.pop %v433
    %v435 = vmul.f32 1.0, %v434
    %v437 = vlaneseq
    %v438 = vshrl.u32 %v437, 7
    %v439 = vsub.s32 0, %v438
    %v440 = vrot.slane %v435, %v439
    %442 = vbcast.lane.b32.xlu0 %v440, 256
    %v443 = vpop.permute.xlu0 %442
    %s445 = sor.u32 256, 8
    %446 = vbcast.lane.b32.xlu0 %v440, %s445
    %v447 = vpop.permute.xlu0 %446
    %s449 = sor.u32 256, 16
    %450 = vbcast.lane.b32.xlu0 %v440, %s449
    %v451 = vpop.permute.xlu0 %450
    %s453 = sor.u32 256, 24
    %454 = vbcast.lane.b32.xlu0 %v440, %s453
    %v455 = vpop.permute.xlu0 %454
    %s457 = sor.u32 256, 32
    %458 = vbcast.lane.b32.xlu0 %v440, %s457
    %v459 = vpop.permute.xlu0 %458
    %s461 = sor.u32 256, 40
    %462 = vbcast.lane.b32.xlu0 %v440, %s461
    %v463 = vpop.permute.xlu0 %462
    %s465 = sor.u32 256, 48
    %466 = vbcast.lane.b32.xlu0 %v440, %s465
    %v467 = vpop.permute.xlu0 %466
    %s469 = sor.u32 256, 56
    %470 = vbcast.lane.b32.xlu0 %v440, %s469
    %v471 = vpop.permute.xlu0 %470
    %v472 = vlaneseq
    %v473 = vshrl.u32 %v472, 7
    %v474 = vsub.s32 1, %v473
    %v475 = vrot.slane %v435, %v474
    %477 = vbcast.lane.b32.xlu0 %v475, 256
    %v478 = vpop.permute.xlu0 %477
    %s480 = sor.u32 256, 8
    %481 = vbcast.lane.b32.xlu0 %v475, %s480
    %v482 = vpop.permute.xlu0 %481
    %s484 = sor.u32 256, 16
    %485 = vbcast.lane.b32.xlu0 %v475, %s484
    %v486 = vpop.permute.xlu0 %485
    %s488 = sor.u32 256, 24
    %489 = vbcast.lane.b32.xlu0 %v475, %s488
    %v490 = vpop.permute.xlu0 %489
    %s492 = sor.u32 256, 32
    %493 = vbcast.lane.b32.xlu0 %v475, %s492
    %v494 = vpop.permute.xlu0 %493
    %s496 = sor.u32 256, 40
    %497 = vbcast.lane.b32.xlu0 %v475, %s496
    %v498 = vpop.permute.xlu0 %497
    %s500 = sor.u32 256, 48
    %501 = vbcast.lane.b32.xlu0 %v475, %s500
    %v502 = vpop.permute.xlu0 %501
    %s504 = sor.u32 256, 56
    %505 = vbcast.lane.b32.xlu0 %v475, %s504
    %v506 = vpop.permute.xlu0 %505
    %v523 = vmul.f32 %v115, %v443
    %v524 = vmul.f32 %v118, %v447
    %v525 = vmul.f32 %v121, %v451
    %v526 = vmul.f32 %v124, %v455
    %v527 = vmul.f32 %v127, %v459
    %v528 = vmul.f32 %v130, %v463
    %v529 = vmul.f32 %v133, %v467
    %v530 = vmul.f32 %v136, %v471
    %v531 = vmul.f32 %v139, %v478
    %v532 = vmul.f32 %v142, %v482
    %v533 = vmul.f32 %v145, %v486
    %v534 = vmul.f32 %v148, %v490
    %v535 = vmul.f32 %v151, %v494
    %v536 = vmul.f32 %v154, %v498
    %v537 = vmul.f32 %v157, %v502
    %v538 = vmul.f32 %v160, %v506
    %v539 = vld [vmem:[%s4] sm:$0xff]
    %v540 = vld [vmem:[%s4 + $0x8] sm:$0xff]
    %v541 = vld [vmem:[%s4 + $0x10] sm:$0xff]
    %v542 = vld [vmem:[%s4 + $0x18] sm:$0xff]
    %v543 = vld [vmem:[%s4 + $0x20] sm:$0xff]
    %v544 = vld [vmem:[%s4 + $0x28] sm:$0xff]
    %v545 = vld [vmem:[%s4 + $0x30] sm:$0xff]
    %v546 = vld [vmem:[%s4 + $0x38] sm:$0xff]
    %v547 = vld [vmem:[%s5] sm:$0x1]
    %v549 = vlaneseq
    %v550 = vshrl.u32 %v549, 7
    %v551 = vsub.s32 0, %v550
    %v552 = vrot.slane %v547, %v551
    %570 = vset.pattern.permute.xlu0 0
    %571 = vperm.xlu0 %570, %v523
    %v572 = vpop.permute.xlu0 %571
    %573 = vset.pattern.permute.xlu0 0
    %574 = vperm.xlu0 %573, %v524
    %v575 = vpop.permute.xlu0 %574
    %576 = vset.pattern.permute.xlu0 0
    %577 = vperm.xlu0 %576, %v525
    %v578 = vpop.permute.xlu0 %577
    %579 = vset.pattern.permute.xlu0 0
    %580 = vperm.xlu0 %579, %v526
    %v581 = vpop.permute.xlu0 %580
    %582 = vset.pattern.permute.xlu0 0
    %583 = vperm.xlu0 %582, %v527
    %v584 = vpop.permute.xlu0 %583
    %585 = vset.pattern.permute.xlu0 0
    %586 = vperm.xlu0 %585, %v528
    %v587 = vpop.permute.xlu0 %586
    %588 = vset.pattern.permute.xlu0 0
    %589 = vperm.xlu0 %588, %v529
    %v590 = vpop.permute.xlu0 %589
    %591 = vset.pattern.permute.xlu0 0
    %592 = vperm.xlu0 %591, %v530
    %v593 = vpop.permute.xlu0 %592
    %594 = vset.pattern.permute.xlu0 0
    %595 = vperm.xlu0 %594, %v531
    %v596 = vpop.permute.xlu0 %595
    %597 = vset.pattern.permute.xlu0 0
    %598 = vperm.xlu0 %597, %v532
    %v599 = vpop.permute.xlu0 %598
    %600 = vset.pattern.permute.xlu0 0
    %601 = vperm.xlu0 %600, %v533
    %v602 = vpop.permute.xlu0 %601
    %603 = vset.pattern.permute.xlu0 0
    %604 = vperm.xlu0 %603, %v534
    %v605 = vpop.permute.xlu0 %604
    %606 = vset.pattern.permute.xlu0 0
    %607 = vperm.xlu0 %606, %v535
    %v608 = vpop.permute.xlu0 %607
    %609 = vset.pattern.permute.xlu0 0
    %610 = vperm.xlu0 %609, %v536
    %v611 = vpop.permute.xlu0 %610
    %612 = vset.pattern.permute.xlu0 0
    %613 = vperm.xlu0 %612, %v537
    %v614 = vpop.permute.xlu0 %613
    %615 = vset.pattern.permute.xlu0 0
    %616 = vperm.xlu0 %615, %v538
    %v617 = vpop.permute.xlu0 %616
    %v618 = vlaneseq
    %v619 = vshrl.u32 %v618, 7
    %v620 = vsub.s32 %v186, %v619
    %v621 = vrot.slane %v572, %v620
    %v622 = vlaneseq
    %v623 = vshrl.u32 %v622, 7
    %v624 = vsub.s32 %v191, %v623
    %v625 = vrot.slane %v575, %v624
    %v626 = vsel %vm196, %v625, %v621
    %v627 = vlaneseq
    %v628 = vshrl.u32 %v627, 7
    %v629 = vsub.s32 %v198, %v628
    %v630 = vrot.slane %v578, %v629
    %v631 = vsel %vm203, %v630, %v626
    %v632 = vlaneseq
    %v633 = vshrl.u32 %v632, 7
    %v634 = vsub.s32 %v205, %v633
    %v635 = vrot.slane %v581, %v634
    %v636 = vsel %vm210, %v635, %v631
    %v637 = vlaneseq
    %v638 = vshrl.u32 %v637, 7
    %v639 = vsub.s32 %v212, %v638
    %v640 = vrot.slane %v584, %v639
    %v641 = vsel %vm217, %v640, %v636
    %v642 = vlaneseq
    %v643 = vshrl.u32 %v642, 7
    %v644 = vsub.s32 %v219, %v643
    %v645 = vrot.slane %v587, %v644
    %v646 = vsel %vm224, %v645, %v641
    %v647 = vlaneseq
    %v648 = vshrl.u32 %v647, 7
    %v649 = vsub.s32 %v226, %v648
    %v650 = vrot.slane %v590, %v649
    %v651 = vsel %vm231, %v650, %v646
    %v652 = vlaneseq
    %v653 = vshrl.u32 %v652, 7
    %v654 = vsub.s32 %v233, %v653
    %v655 = vrot.slane %v593, %v654
    %v656 = vsel %vm238, %v655, %v651
    %v657 = vlaneseq
    %v658 = vshrl.u32 %v657, 7
    %v659 = vsub.s32 %v186, %v658
    %v660 = vrot.slane %v596, %v659
    %v661 = vlaneseq
    %v662 = vshrl.u32 %v661, 7
    %v663 = vsub.s32 %v191, %v662
    %v664 = vrot.slane %v599, %v663
    %v665 = vsel %vm196, %v664, %v660
    %v666 = vlaneseq
    %v667 = vshrl.u32 %v666, 7
    %v668 = vsub.s32 %v198, %v667
    %v669 = vrot.slane %v602, %v668
    %v670 = vsel %vm203, %v669, %v665
    %v671 = vlaneseq
    %v672 = vshrl.u32 %v671, 7
    %v673 = vsub.s32 %v205, %v672
    %v674 = vrot.slane %v605, %v673
    %v675 = vsel %vm210, %v674, %v670
    %v676 = vlaneseq
    %v677 = vshrl.u32 %v676, 7
    %v678 = vsub.s32 %v212, %v677
    %v679 = vrot.slane %v608, %v678
    %v680 = vsel %vm217, %v679, %v675
    %v681 = vlaneseq
    %v682 = vshrl.u32 %v681, 7
    %v683 = vsub.s32 %v219, %v682
    %v684 = vrot.slane %v611, %v683
    %v685 = vsel %vm224, %v684, %v680
    %v686 = vlaneseq
    %v687 = vshrl.u32 %v686, 7
    %v688 = vsub.s32 %v226, %v687
    %v689 = vrot.slane %v614, %v688
    %v690 = vsel %vm231, %v689, %v685
    %v691 = vlaneseq
    %v692 = vshrl.u32 %v691, 7
    %v693 = vsub.s32 %v233, %v692
    %v694 = vrot.slane %v617, %v693
    %v695 = vsel %vm238, %v694, %v690
    %v696 = vsel %vm279, %v695, %v656
    %v697 = vsel %vm281, %v696, 0
    %699 = vmatprep.subr.mxu0 0.0
    %700 = vmatpush1.msra.mxu0 0.0
    %701 = vmatprep.subr.mxu0 0.0
    %702 = vmatpush1.msra.mxu0 0.0
    %703 = vmatprep.subr.mxu0 0.0
    %704 = vmatpush1.msra.mxu0 0.0
    %705 = vmatprep.subr.mxu0 0.0
    %706 = vmatpush1.msra.mxu0 0.0
    %707 = vmatprep.subr.mxu0 0.0
    %708 = vmatpush1.msra.mxu0 0.0
    %709 = vmatprep.subr.mxu0 0.0
    %710 = vmatpush1.msra.mxu0 0.0
    %711 = vmatprep.subr.mxu0 0.0
    %712 = vmatpush1.msra.mxu0 0.0
    %713 = vmatprep.subr.mxu0 0.0
    %714 = vmatpush1.msra.mxu0 0.0
    %715 = vmatprep.subr.mxu0 0.0
    %716 = vmatpush1.msra.mxu0 %v546
    %717 = vmatprep.subr.mxu0 0.0
    %718 = vmatpush1.msra.mxu0 %v545
    %719 = vmatprep.subr.mxu0 0.0
    %720 = vmatpush1.msra.mxu0 %v544
    %721 = vmatprep.subr.mxu0 0.0
    %722 = vmatpush1.msra.mxu0 %v543
    %723 = vmatprep.subr.mxu0 0.0
    %724 = vmatpush1.msra.mxu0 %v542
    %725 = vmatprep.subr.mxu0 0.0
    %726 = vmatpush1.msra.mxu0 %v541
    %727 = vmatprep.subr.mxu0 0.0
    %728 = vmatpush1.msra.mxu0 %v540
    %729 = vmatprep.subr.mxu0 0.0
    %730 = vmatpush1.msra.mxu0 %v539
    %731 = vmatprep.subr.mxu0 0.0
    %732 = vmatpush2.msra.mxu0 0.0
    %733 = vmatprep.subr.mxu0 0.0
    %734 = vmatpush2.msra.mxu0 0.0
    %735 = vmatprep.subr.mxu0 0.0
    %736 = vmatpush2.msra.mxu0 0.0
    %737 = vmatprep.subr.mxu0 0.0
    %738 = vmatpush2.msra.mxu0 0.0
    %739 = vmatprep.subr.mxu0 0.0
    %740 = vmatpush2.msra.mxu0 0.0
    %741 = vmatprep.subr.mxu0 0.0
    %742 = vmatpush2.msra.mxu0 0.0
    %743 = vmatprep.subr.mxu0 0.0
    %744 = vmatpush2.msra.mxu0 0.0
    %745 = vmatprep.subr.mxu0 0.0
    %746 = vmatpush2.msra.mxu0 0.0
    %747 = vmatprep.subr.mxu0 0.0
    %748 = vmatpush2.msra.mxu0 0.0
    %749 = vmatprep.subr.mxu0 0.0
    %750 = vmatpush2.msra.mxu0 0.0
    %751 = vmatprep.subr.mxu0 0.0
    %752 = vmatpush2.msra.mxu0 0.0
    %753 = vmatprep.subr.mxu0 0.0
    %754 = vmatpush2.msra.mxu0 0.0
    %755 = vmatprep.subr.mxu0 0.0
    %756 = vmatpush2.msra.mxu0 0.0
    %757 = vmatprep.subr.mxu0 0.0
    %758 = vmatpush2.msra.mxu0 0.0
    %759 = vmatprep.subr.mxu0 0.0
    %760 = vmatpush2.msra.mxu0 0.0
    %761 = vmatprep.subr.mxu0 0.0
    %762 = vmatpush2.msra.mxu0 0.0
    %763 = vmatprep.mubr.f32.mxu0 0.0
    %764 = vmatmul.mubr.f32.gmra.mxu0 %v697
    %v765 = vpop.f32.mrf.mxu0
    %v766 = vadd.f32 %v552, %v765
    %v767 = vpop.f32.mrf.mxu0
    %768 = vdwg.mxu0
    %vm769 = vcmask 123904
    %770 = vst.msk [vmem:[#allocation2] sm:$0x3] %vm769, %v766
    // Predicated region
    $region26: #{tpu_custom_call.1} parent=1 // pred_check
      _
    $region27: #{tpu_custom_call.1} parent=1 // pred_check_branch
      %772 = sbr.rel (0) target = $region29
    $region28: #{tpu_custom_call.1} parent=1 // pred_region
      %s774 = ssub.s32 32, 32
      %775 = vsyncadd [#allocation3], %s774
      %s777 = sshll.u32 [#allocation2], 4
      %s778 = int_to_ptr.vmem [resolvable:$true] %s777
      %780 = dma.vmem_to_hbm [thread:$0]  %s778, 32, %s6, [#allocation3]
    $region29: #{tpu_custom_call.1} parent=1 // pred_fallthru
      _
    // Predicated region
    $region30: #{tpu_custom_call.1} parent=1 // pred_check
      _
    $region31: #{tpu_custom_call.1} parent=1 // pred_check_branch
      %782 = sbr.rel (0) target = $region33
    $region32: #{tpu_custom_call.1} parent=1 // pred_region
      %783 = dma.done [#allocation3], 32
    $region33: #{tpu_custom_call.1} parent=1 // pred_fallthru
      _
    %784 = vsyncpa [#allocation3], 1

</llo_original>
